<compile_context>
chip_gen: v5e
topology: v5e:2x2
jax: 0.10.0
libtpu: 0.0.40
codegen_flags: <defaults>
</compile_context>

<pallas_src>
import jax
import jax.numpy as jnp
from jax import lax
from jax.experimental import pallas as pl
from jax.experimental.pallas import tpu as pltpu

EPS = 1e-8  # matches nn.GroupNorm(1, out_ch, eps=1e-08)
_MAX_HW_TILE = 8192           # lanes; capped further by the VMEM budget below
_VMEM_TILE_BUDGET = 24 << 20  # per-step working-set budget (safe on v5e/v6e/v7x)


def _round_up(x, m):
    return (x + m - 1) // m * m


def _make_inconv_kernel(Cout, HW_real):
    """Kernel closure over the static channel count and *real* (unpadded) H*W."""
    HWf = float(HW_real)
    n_elems = float(Cout) * HWf

    def kernel(x_ref, w_ref, b_ref, gamma_ref, beta_ref, alpha_ref, o_ref,
               s0_ref, ss0_ref, scale_ref, shift_ref):
        # x_ref:     (1, Cin, HW_TILE)   current sample / HW tile (HW on lanes)
        # w_ref:     (Cout, Cin)         1x1 conv weight
        # b_ref:     (Cout, 1)           conv bias
        # gamma_ref: (Cout, 1)           GroupNorm weight
        # beta_ref:  (Cout, 1)           GroupNorm bias
        # alpha_ref: (1,) in SMEM        PReLU slope (single shared parameter)
        # o_ref:     (1, Cout, HW_TILE)
        # s0/ss0:    (Cout, 1) f32 VMEM  per-channel sum / sumsq of bias-free conv
        # scale/shift: (Cout, 1) f32     folded GroupNorm affine, per sample
        p = pl.program_id(1)   # 0 = stats pass, 1 = normalize/write pass
        t = pl.program_id(2)   # HW-tile index

        # Bias-free 1x1 conv on this tile (channel-major matmul, f32 accumulate).
        x = x_ref[0]                                               # (Cin, HW_TILE)
        y0 = jnp.dot(w_ref[...], x, preferred_element_type=jnp.float32)

        @pl.when(jnp.logical_and(p == 0, t == 0))
        def _():
            s0_ref[...] = jnp.zeros_like(s0_ref)
            ss0_ref[...] = jnp.zeros_like(ss0_ref)

        @pl.when(p == 0)
        def _():
            # Per-channel (lane-axis) partials, accumulated across HW tiles.
            # Zero-padded tail columns contribute exactly zero.
            s0_ref[...] += jnp.sum(y0, axis=-1, keepdims=True)
            ss0_ref[...] += jnp.sum(y0 * y0, axis=-1, keepdims=True)

        @pl.when(jnp.logical_and(p == 1, t == 0))
        def _():
            # Finalize stats once per sample; fold everything into scale/shift.
            b = b_ref[...].astype(jnp.float32)
            gamma = gamma_ref[...].astype(jnp.float32)
            beta = beta_ref[...].astype(jnp.float32)
            s0 = s0_ref[...]
            ss0 = ss0_ref[...]
            mean = (jnp.sum(s0) + HWf * jnp.sum(b)) / n_elems
            d = b - mean
            # Exact biased variance about the per-channel bias: no E[y^2]-E[y]^2
            # cancellation from a bias-shifted mean.
            var = jnp.sum(ss0 + 2.0 * d * s0 + HWf * (d * d)) / n_elems
            var = jnp.maximum(var, jnp.float32(0.0))
            inv = lax.rsqrt(var + EPS)                            # EUP rsqrt
            scale = gamma * inv
            scale_ref[...] = scale
            shift_ref[...] = beta + d * scale                     # folds conv bias too

        @pl.when(p == 1)
        def _():
            z = y0 * scale_ref[...] + shift_ref[...]              # GN affine (folded)
            a = alpha_ref[0].astype(jnp.float32)
            out = z * jnp.where(z >= 0, jnp.float32(1.0), a)      # PReLU, one mul
            o_ref[0] = out.astype(o_ref.dtype)

    return kernel


def inconv_pallas(x_nchw, w, b, gamma, beta, alpha):
    """x_nchw: (N, Cin, H, W). Returns (N, Cout, H, W)."""
    N, Cin, H, W = x_nchw.shape
    Cout = w.shape[0]
    HW = H * W
    itemsize = jnp.dtype(x_nchw.dtype).itemsize

    # --- HW tile sizing: multiple of 128, as large as the VMEM budget allows. ---
    def footprint(t):
        return (2 * Cin * t * itemsize        # x tile, double-buffered
                + 2 * Cout * t * itemsize     # out tile, double-buffered
                + 2 * Cout * t * 4)           # f32 conv temp + fused temporaries

    tile = min(_round_up(HW, 128), _MAX_HW_TILE)
    while tile > 128 and footprint(tile) > _VMEM_TILE_BUDGET:
        tile -= 128
    HW_pad = _round_up(HW, tile)
    num_tiles = HW_pad // tile

    # VMEM limit derived from actual block sizes (+headroom), never the full v7x VMEM.
    vmem_limit = int(min(max(2 * footprint(tile) + (4 << 20), 16 << 20), 48 << 20))

    # NCHW-native: reshape only; zero-pad the HW tail so stores stay lane-dense.
    x_flat = x_nchw.reshape(N, Cin, HW)
    if HW_pad != HW:
        x_flat = jnp.pad(x_flat, ((0, 0), (0, 0), (0, HW_pad - HW)))
    w2d = w.reshape(Cout, Cin)
    b2d = b.reshape(Cout, 1)
    gamma2d = gamma.reshape(Cout, 1)
    beta2d = beta.reshape(Cout, 1)
    alpha1d = alpha.reshape(1)

    kernel = _make_inconv_kernel(Cout, HW)

    cost = pl.CostEstimate(
        flops=int(4 * N * Cout * Cin * HW_pad),                      # conv done twice
        transcendentals=int(N),                                      # one rsqrt/sample
        bytes_accessed=int(N * (2 * Cin + Cout) * HW_pad * itemsize))

    out_flat = pl.pallas_call(
        kernel,
        out_shape=jax.ShapeDtypeStruct((N, Cout, HW_pad), x_nchw.dtype),
        grid_spec=pltpu.PrefetchScalarGridSpec(
            num_scalar_prefetch=0,
            grid=(N, 2, num_tiles),
            in_specs=[
                pl.BlockSpec((1, Cin, tile), lambda n, p, t: (n, 0, t)),
                pl.BlockSpec((Cout, Cin), lambda n, p, t: (0, 0)),
                pl.BlockSpec((Cout, 1), lambda n, p, t: (0, 0)),
                pl.BlockSpec((Cout, 1), lambda n, p, t: (0, 0)),
                pl.BlockSpec((Cout, 1), lambda n, p, t: (0, 0)),
                pl.BlockSpec(memory_space=pltpu.MemorySpace.SMEM),
            ],
            # During pass 0 the output block index is pinned to (n,0,0) so nothing
            # is flushed; pass 1 visits (n,0,t) and writes every tile exactly once.
            out_specs=pl.BlockSpec((1, Cout, tile), lambda n, p, t: (n, 0, t * p)),
            scratch_shapes=[
                pltpu.VMEM((Cout, 1), jnp.float32),   # per-channel sum
                pltpu.VMEM((Cout, 1), jnp.float32),   # per-channel sumsq
                pltpu.VMEM((Cout, 1), jnp.float32),   # folded scale
                pltpu.VMEM((Cout, 1), jnp.float32),   # folded shift
            ],
        ),
        compiler_params=pltpu.CompilerParams(
            dimension_semantics=("parallel", "arbitrary", "arbitrary"),
            vmem_limit_bytes=vmem_limit,
        ),
        cost_estimate=cost,
    )(x_flat, w2d, b2d, gamma2d, beta2d, alpha1d)

    # TODO(synk): when N is tiny (1-2) on v7x, split HW halves across the two
    # TensorCores with a small partial-stat merge through VMEM_SHARED/CMEM.
    return out_flat[:, :, :HW].reshape(N, Cout, H, W)


def inconv_reference(x_nchw, w, b, gamma, beta, alpha):
    """Pure-JAX reference mirroring the PyTorch forward."""
    N, Cin, H, W = x_nchw.shape
    Cout = w.shape[0]
    # 1x1 conv
    y = jnp.einsum("nchw,oc->nohw", x_nchw, w.reshape(Cout, Cin)) \
        + b.reshape(1, Cout, 1, 1)
    # GroupNorm(1, Cout), eps=1e-8, biased variance
    mean = jnp.mean(y, axis=(1, 2, 3), keepdims=True)
    var = jnp.var(y, axis=(1, 2, 3), keepdims=True)
    yn = (y - mean) / jnp.sqrt(var + EPS)
    yn = yn * gamma.reshape(1, Cout, 1, 1) + beta.reshape(1, Cout, 1, 1)
    # PReLU (single shared slope)
    return jnp.where(yn >= 0, yn, alpha.reshape(()) * yn)


if __name__ == "__main__":
    key = jax.random.PRNGKey(0)
    k_x, k_w, k_b = jax.random.split(key, 3)

    N, Cin, Cout, H, W = 2, 4, 8, 16, 16

    x = jax.random.normal(k_x, (N, Cin, H, W), dtype=jnp.float32)

    # Conv2d(in_ch, out_ch, 1): weight (Cout, Cin, 1, 1), bias (Cout,)
    w = 0.1 * jax.random.normal(k_w, (Cout, Cin, 1, 1), dtype=jnp.float32)
    b = 0.05 * jax.random.normal(k_b, (Cout,), dtype=jnp.float32)
    # GroupNorm(1, out_ch): weight=1, bias=0
    gamma = jnp.ones((Cout,), dtype=jnp.float32)
    beta = jnp.zeros((Cout,), dtype=jnp.float32)
    # PReLU(): single slope, default init 0.25
    alpha = jnp.array([0.25], dtype=jnp.float32)

    out = jax.jit(inconv_pallas)(x, w, b, gamma, beta, alpha)
    jax.block_until_ready(out)

    ref = inconv_reference(x, w, b, gamma, beta, alpha)
    assert out.shape == (N, Cout, H, W)
    assert jnp.allclose(out, ref, atol=1e-4, rtol=1e-4), "mismatch vs reference"

    print("KERNEL_OK")
</pallas_src>

<mosaic_0001>
module attributes {stable_mosaic.version = 11 : i64} {
  func.func @kernel(%arg0: i32, %arg1: i32, %arg2: i32, %arg3: memref<1x4x256xf32, #tpu.memory_space<vmem>>, %arg4: memref<8x4xf32, #tpu.memory_space<vmem>>, %arg5: memref<8x1xf32, #tpu.memory_space<vmem>>, %arg6: memref<8x1xf32, #tpu.memory_space<vmem>>, %arg7: memref<8x1xf32, #tpu.memory_space<vmem>>, %arg8: memref<1xf32, #tpu.memory_space<smem>>, %arg9: memref<1x8x256xf32, #tpu.memory_space<vmem>>, %arg10: memref<8x1xf32, #tpu.memory_space<vmem>>, %arg11: memref<8x1xf32, #tpu.memory_space<vmem>>, %arg12: memref<8x1xf32, #tpu.memory_space<vmem>>, %arg13: memref<8x1xf32, #tpu.memory_space<vmem>>) attributes {dimension_semantics = [#tpu.dimension_semantics<parallel>, #tpu.dimension_semantics<arbitrary>, #tpu.dimension_semantics<arbitrary>], iteration_bounds = array<i64: 2, 2, 1>, scalar_prefetch = 0 : i64, scratch_operands = 4 : i64, tpu.core_type = #tpu.core_type<tc>, window_params = [{transform_indices = @transform_0, window_bounds = array<i64: 1, 4, 256>}, {pipeline_mode = #tpu.pipeline_mode<synchronous>, transform_indices = @transform_1, window_bounds = array<i64: 8, 4>}, {pipeline_mode = #tpu.pipeline_mode<synchronous>, transform_indices = @transform_2, window_bounds = array<i64: 8, 1>}, {pipeline_mode = #tpu.pipeline_mode<synchronous>, transform_indices = @transform_3, window_bounds = array<i64: 8, 1>}, {pipeline_mode = #tpu.pipeline_mode<synchronous>, transform_indices = @transform_4, window_bounds = array<i64: 8, 1>}, {transform_indices = @transform_5, window_bounds = array<i64: 1>}, {transform_indices = @transform_6, window_bounds = array<i64: 1, 8, 256>}]} {
    %c0 = arith.constant 0 : index
    %c0_0 = arith.constant 0 : index
    %c0_1 = arith.constant 0 : index
    %0 = vector.load %arg3[%c0, %c0_0, %c0_1] : memref<1x4x256xf32, #tpu.memory_space<vmem>>, vector<1x4x256xf32>
    %1 = vector.shape_cast %0 : vector<1x4x256xf32> to vector<4x256xf32>
    %c0_2 = arith.constant 0 : index
    %c0_3 = arith.constant 0 : index
    %2 = vector.load %arg4[%c0_2, %c0_3] : memref<8x4xf32, #tpu.memory_space<vmem>>, vector<8x4xf32>
    %cst = arith.constant dense<0.000000e+00> : vector<8x256xf32>
    %3 = tpu.matmul %2, %1, %cst {dimension_numbers = #tpu.dot_dimension_numbers<[1], [0], [0], [1], [0, 0, 1, 1], [], []>} : vector<8x4xf32>, vector<4x256xf32>, vector<8x256xf32> -> vector<8x256xf32>
    %c0_i32 = arith.constant 0 : i32
    %4 = arith.cmpi eq, %arg1, %c0_i32 : i32
    %c0_i32_4 = arith.constant 0 : i32
    %5 = arith.cmpi eq, %arg2, %c0_i32_4 : i32
    %6 = arith.andi %4, %5 : i1
    %7 = arith.extui %6 : i1 to i32
    %c0_i32_5 = arith.constant 0 : i32
    %8 = arith.cmpi ne, %7, %c0_i32_5 : i32
    scf.if %8 {
      %cst_12 = arith.constant 0.000000e+00 : f32
      %20 = vector.broadcast %cst_12 : f32 to vector<8x1xf32>
      %c0_13 = arith.constant 0 : index
      %c0_14 = arith.constant 0 : index
      %21 = vector.load %arg10[%c0_13, %c0_14] : memref<8x1xf32, #tpu.memory_space<vmem>>, vector<8x1xf32>
      tpu.vector_store %arg10[%c0_13, %c0_14], %20 {strides = array<i32>} : memref<8x1xf32, #tpu.memory_space<vmem>>, vector<8x1xf32>,
      %cst_15 = arith.constant 0.000000e+00 : f32
      %22 = vector.broadcast %cst_15 : f32 to vector<8x1xf32>
      %c0_16 = arith.constant 0 : index
      %c0_17 = arith.constant 0 : index
      %23 = vector.load %arg11[%c0_16, %c0_17] : memref<8x1xf32, #tpu.memory_space<vmem>>, vector<8x1xf32>
      tpu.vector_store %arg11[%c0_16, %c0_17], %22 {strides = array<i32>} : memref<8x1xf32, #tpu.memory_space<vmem>>, vector<8x1xf32>,
    } else {
    }
    %c0_i32_6 = arith.constant 0 : i32
    %9 = arith.cmpi eq, %arg1, %c0_i32_6 : i32
    %10 = arith.extui %9 : i1 to i32
    %c0_i32_7 = arith.constant 0 : i32
    %11 = arith.cmpi ne, %10, %c0_i32_7 : i32
    scf.if %11 {
      %c0_12 = arith.constant 0 : index
      %c0_13 = arith.constant 0 : index
      %20 = vector.load %arg10[%c0_12, %c0_13] : memref<8x1xf32, #tpu.memory_space<vmem>>, vector<8x1xf32>
      %cst_14 = arith.constant dense<0.000000e+00> : vector<8xf32>
      %21 = vector.multi_reduction <add>, %3, %cst_14 [1] : vector<8x256xf32> to vector<8xf32>
      %22 = vector.shape_cast %21 : vector<8xf32> to vector<8x1xf32>
      %23 = arith.addf %20, %22 : vector<8x1xf32>
      %c0_15 = arith.constant 0 : index
      %c0_16 = arith.constant 0 : index
      %24 = vector.load %arg10[%c0_15, %c0_16] : memref<8x1xf32, #tpu.memory_space<vmem>>, vector<8x1xf32>
      tpu.vector_store %arg10[%c0_15, %c0_16], %23 {strides = array<i32>} : memref<8x1xf32, #tpu.memory_space<vmem>>, vector<8x1xf32>,
      %c0_17 = arith.constant 0 : index
      %c0_18 = arith.constant 0 : index
      %25 = vector.load %arg11[%c0_17, %c0_18] : memref<8x1xf32, #tpu.memory_space<vmem>>, vector<8x1xf32>
      %26 = arith.mulf %3, %3 : vector<8x256xf32>
      %cst_19 = arith.constant dense<0.000000e+00> : vector<8xf32>
      %27 = vector.multi_reduction <add>, %26, %cst_19 [1] : vector<8x256xf32> to vector<8xf32>
      %28 = vector.shape_cast %27 : vector<8xf32> to vector<8x1xf32>
      %29 = arith.addf %25, %28 : vector<8x1xf32>
      %c0_20 = arith.constant 0 : index
      %c0_21 = arith.constant 0 : index
      %30 = vector.load %arg11[%c0_20, %c0_21] : memref<8x1xf32, #tpu.memory_space<vmem>>, vector<8x1xf32>
      tpu.vector_store %arg11[%c0_20, %c0_21], %29 {strides = array<i32>} : memref<8x1xf32, #tpu.memory_space<vmem>>, vector<8x1xf32>,
    } else {
    }
    %c1_i32 = arith.constant 1 : i32
    %12 = arith.cmpi eq, %arg1, %c1_i32 : i32
    %c0_i32_8 = arith.constant 0 : i32
    %13 = arith.cmpi eq, %arg2, %c0_i32_8 : i32
    %14 = arith.andi %12, %13 : i1
    %15 = arith.extui %14 : i1 to i32
    %c0_i32_9 = arith.constant 0 : i32
    %16 = arith.cmpi ne, %15, %c0_i32_9 : i32
    scf.if %16 {
      %c0_12 = arith.constant 0 : index
      %c0_13 = arith.constant 0 : index
      %20 = vector.load %arg5[%c0_12, %c0_13] : memref<8x1xf32, #tpu.memory_space<vmem>>, vector<8x1xf32>
      %c0_14 = arith.constant 0 : index
      %c0_15 = arith.constant 0 : index
      %21 = vector.load %arg6[%c0_14, %c0_15] : memref<8x1xf32, #tpu.memory_space<vmem>>, vector<8x1xf32>
      %c0_16 = arith.constant 0 : index
      %c0_17 = arith.constant 0 : index
      %22 = vector.load %arg7[%c0_16, %c0_17] : memref<8x1xf32, #tpu.memory_space<vmem>>, vector<8x1xf32>
      %c0_18 = arith.constant 0 : index
      %c0_19 = arith.constant 0 : index
      %23 = vector.load %arg10[%c0_18, %c0_19] : memref<8x1xf32, #tpu.memory_space<vmem>>, vector<8x1xf32>
      %c0_20 = arith.constant 0 : index
      %c0_21 = arith.constant 0 : index
      %24 = vector.load %arg11[%c0_20, %c0_21] : memref<8x1xf32, #tpu.memory_space<vmem>>, vector<8x1xf32>
      %25 = vector.shape_cast %23 : vector<8x1xf32> to vector<1x8x1xf32>
      %cst_22 = arith.constant dense<0.000000e+00> : vector<1xf32>
      %26 = vector.multi_reduction <add>, %25, %cst_22 [1, 2] : vector<1x8x1xf32> to vector<1xf32>
      %27 = vector.shape_cast %26 : vector<1xf32> to vector<1x1x1xf32>
      %28 = vector.extract %27[0, 0, 0] : f32 from vector<1x1x1xf32>
      %29 = vector.shape_cast %20 : vector<8x1xf32> to vector<1x8x1xf32>
      %cst_23 = arith.constant dense<0.000000e+00> : vector<1xf32>
      %30 = vector.multi_reduction <add>, %29, %cst_23 [1, 2] : vector<1x8x1xf32> to vector<1xf32>
      %31 = vector.shape_cast %30 : vector<1xf32> to vector<1x1x1xf32>
      %32 = vector.extract %31[0, 0, 0] : f32 from vector<1x1x1xf32>
      %cst_24 = arith.constant 2.560000e+02 : f32
      %33 = arith.mulf %cst_24, %32 : f32
      %34 = arith.addf %28, %33 : f32
      %cst_25 = arith.constant 2.048000e+03 : f32
      %35 = arith.divf %34, %cst_25 : f32
      %36 = vector.broadcast %35 : f32 to vector<8x1xf32>
      %37 = arith.subf %20, %36 : vector<8x1xf32>
      %cst_26 = arith.constant 2.000000e+00 : f32
      %38 = vector.broadcast %cst_26 : f32 to vector<8x1xf32>
      %39 = arith.mulf %38, %37 : vector<8x1xf32>
      %40 = arith.mulf %39, %23 : vector<8x1xf32>
      %41 = arith.addf %24, %40 : vector<8x1xf32>
      %42 = arith.mulf %37, %37 : vector<8x1xf32>
      %cst_27 = arith.constant 2.560000e+02 : f32
      %43 = vector.broadcast %cst_27 : f32 to vector<8x1xf32>
      %44 = arith.mulf %43, %42 : vector<8x1xf32>
      %45 = arith.addf %41, %44 : vector<8x1xf32>
      %46 = vector.shape_cast %45 : vector<8x1xf32> to vector<1x8x1xf32>
      %cst_28 = arith.constant dense<0.000000e+00> : vector<1xf32>
      %47 = vector.multi_reduction <add>, %46, %cst_28 [1, 2] : vector<1x8x1xf32> to vector<1xf32>
      %48 = vector.shape_cast %47 : vector<1xf32> to vector<1x1x1xf32>
      %49 = vector.extract %48[0, 0, 0] : f32 from vector<1x1x1xf32>
      %cst_29 = arith.constant 2.048000e+03 : f32
      %50 = arith.divf %49, %cst_29 : f32
      %cst_30 = arith.constant 0.000000e+00 : f32
      %51 = arith.maximumf %50, %cst_30 : f32
      %cst_31 = arith.constant 9.99999993E-9 : f32
      %52 = arith.addf %51, %cst_31 : f32
      %53 = math.rsqrt %52 : f32
      %54 = vector.broadcast %53 : f32 to vector<8x1xf32>
      %55 = arith.mulf %21, %54 : vector<8x1xf32>
      %c0_32 = arith.constant 0 : index
      %c0_33 = arith.constant 0 : index
      %56 = vector.load %arg12[%c0_32, %c0_33] : memref<8x1xf32, #tpu.memory_space<vmem>>, vector<8x1xf32>
      tpu.vector_store %arg12[%c0_32, %c0_33], %55 {strides = array<i32>} : memref<8x1xf32, #tpu.memory_space<vmem>>, vector<8x1xf32>,
      %57 = arith.mulf %37, %55 : vector<8x1xf32>
      %58 = arith.addf %22, %57 : vector<8x1xf32>
      %c0_34 = arith.constant 0 : index
      %c0_35 = arith.constant 0 : index
      %59 = vector.load %arg13[%c0_34, %c0_35] : memref<8x1xf32, #tpu.memory_space<vmem>>, vector<8x1xf32>
      tpu.vector_store %arg13[%c0_34, %c0_35], %58 {strides = array<i32>} : memref<8x1xf32, #tpu.memory_space<vmem>>, vector<8x1xf32>,
    } else {
    }
    %c1_i32_10 = arith.constant 1 : i32
    %17 = arith.cmpi eq, %arg1, %c1_i32_10 : i32
    %18 = arith.extui %17 : i1 to i32
    %c0_i32_11 = arith.constant 0 : i32
    %19 = arith.cmpi ne, %18, %c0_i32_11 : i32
    scf.if %19 {
      %c0_12 = arith.constant 0 : index
      %c0_13 = arith.constant 0 : index
      %20 = vector.load %arg12[%c0_12, %c0_13] : memref<8x1xf32, #tpu.memory_space<vmem>>, vector<8x1xf32>
      %21 = vector.broadcast %20 : vector<8x1xf32> to vector<8x256xf32>
      %22 = arith.mulf %3, %21 : vector<8x256xf32>
      %c0_14 = arith.constant 0 : index
      %c0_15 = arith.constant 0 : index
      %23 = vector.load %arg13[%c0_14, %c0_15] : memref<8x1xf32, #tpu.memory_space<vmem>>, vector<8x1xf32>
      %24 = vector.broadcast %23 : vector<8x1xf32> to vector<8x256xf32>
      %25 = arith.addf %22, %24 : vector<8x256xf32>
      %c0_16 = arith.constant 0 : index
      %26 = memref.load %arg8[%c0_16] : memref<1xf32, #tpu.memory_space<smem>>
      %cst_17 = arith.constant 0.000000e+00 : f32
      %27 = vector.broadcast %cst_17 : f32 to vector<8x256xf32>
      %28 = arith.cmpf oge, %25, %27 : vector<8x256xf32>
      %cst_18 = arith.constant 1.000000e+00 : f32
      %29 = vector.broadcast %cst_18 : f32 to vector<8x256xf32>
      %30 = vector.broadcast %26 : f32 to vector<8x256xf32>
      %31 = arith.select %28, %29, %30 : vector<8x256xi1>, vector<8x256xf32>
      %32 = arith.mulf %25, %31 : vector<8x256xf32>
      %c0_19 = arith.constant 0 : index
      %c0_20 = arith.constant 0 : index
      %c0_21 = arith.constant 0 : index
      %33 = vector.load %arg9[%c0_19, %c0_20, %c0_21] : memref<1x8x256xf32, #tpu.memory_space<vmem>>, vector<1x8x256xf32>
      %34 = vector.shape_cast %33 : vector<1x8x256xf32> to vector<8x256xf32>
      %35 = vector.shape_cast %32 : vector<8x256xf32> to vector<1x8x256xf32>
      tpu.vector_store %arg9[%c0_19, %c0_20, %c0_21], %35 {strides = array<i32>} : memref<1x8x256xf32, #tpu.memory_space<vmem>>, vector<1x8x256xf32>,
    } else {
    }
    return
  }
  func.func @transform_0(%arg0: i32, %arg1: i32, %arg2: i32) -> (i32, i32, i32) {
    %c0_i32 = arith.constant 0 : i32
    %c0_i32_0 = arith.constant 0 : i32
    return %arg0, %c0_i32, %arg2 : i32, i32, i32
  }
  func.func @transform_1(%arg0: i32, %arg1: i32, %arg2: i32) -> (i32, i32) {
    %c0_i32 = arith.constant 0 : i32
    %c0_i32_0 = arith.constant 0 : i32
    %c0_i32_1 = arith.constant 0 : i32
    return %c0_i32, %c0_i32_0 : i32, i32
  }
  func.func @transform_2(%arg0: i32, %arg1: i32, %arg2: i32) -> (i32, i32) {
    %c0_i32 = arith.constant 0 : i32
    %c0_i32_0 = arith.constant 0 : i32
    %c0_i32_1 = arith.constant 0 : i32
    return %c0_i32, %c0_i32_0 : i32, i32
  }
  func.func @transform_3(%arg0: i32, %arg1: i32, %arg2: i32) -> (i32, i32) {
    %c0_i32 = arith.constant 0 : i32
    %c0_i32_0 = arith.constant 0 : i32
    %c0_i32_1 = arith.constant 0 : i32
    return %c0_i32, %c0_i32_0 : i32, i32
  }
  func.func @transform_4(%arg0: i32, %arg1: i32, %arg2: i32) -> (i32, i32) {
    %c0_i32 = arith.constant 0 : i32
    %c0_i32_0 = arith.constant 0 : i32
    %c0_i32_1 = arith.constant 0 : i32
    return %c0_i32, %c0_i32_0 : i32, i32
  }
  func.func @transform_5(%arg0: i32, %arg1: i32, %arg2: i32) -> i32 {
    %c0_i32 = arith.constant 0 : i32
    %c0_i32_0 = arith.constant 0 : i32
    return %c0_i32 : i32
  }
  func.func @transform_6(%arg0: i32, %arg1: i32, %arg2: i32) -> (i32, i32, i32) {
    %0 = arith.muli %arg2, %arg1 : i32
    %c0_i32 = arith.constant 0 : i32
    %c0_i32_0 = arith.constant 0 : i32
    return %arg0, %c0_i32, %0 : i32, i32, i32
  }
}

</mosaic_0001>

<llo_original>
// kernel: inconv_pallas.1
$region0: #{inconv_pallas.1}
  #allocation0 [shape = 'u32[]', space=smem, size = 0x4, offset = 0x4, fixed_abs, tag = 'smem constant byte address 0x4 - core index']
  #allocation1 [shape = 'u32[72,128]{1,0:T(1,128)}', space=vmem, size = 0x9000, scoped, tag = 'internal scratch']
  #allocation2 [shape = 'f32[8,1]{1,0:T(8,128)}', space=vmem, size = 0x1000, scoped, tag = 'scratch operand']
  #allocation3 [shape = 'f32[8,1]{1,0:T(8,128)}', space=vmem, size = 0x1000, scoped, tag = 'scratch operand']
  #allocation4 [shape = 'f32[8,1]{1,0:T(8,128)}', space=vmem, size = 0x1000, scoped, tag = 'scratch operand']
  #allocation5 [shape = 'f32[8,1]{1,0:T(8,128)}', space=vmem, size = 0x1000, scoped, tag = 'scratch operand']
  #allocation6 [shape = 'f32[1]{0:T(128)S(6)}', space=smem, size = 0x200, scoped, tag = 'scoped memory for inconv_pallas.1']
  %s0 = inlined_call_operand.vmem [shape: f32[2,4,256], index: 0, kind: input, shape index: {}]
  %s1 = inlined_call_operand.vmem [shape: f32[8,4], index: 1, kind: input, shape index: {}]
  %s2 = inlined_call_operand.vmem [shape: f32[8,1], index: 2, kind: input, shape index: {}]
  %s3 = inlined_call_operand.vmem [shape: f32[8,1], index: 3, kind: input, shape index: {}]
  %s4 = inlined_call_operand.vmem [shape: f32[8,1], index: 4, kind: input, shape index: {}]
  %s5 = inlined_call_operand.<no memory space> [shape: f32[1], index: 5, kind: input, shape index: {}]
  %s6 = inlined_call_operand.vmem [shape: f32[2,8,256], index: 6, kind: output, shape index: {}]
  %s7 = sld [smem:[#allocation0]]
  $region73: #{inconv_pallas.1} parent=0
    _
  %s9 = ssub.s32 1, %s7
  %s10 = scalar_select 0, %s9, %s7
  %11 = sst [smem:[#allocation6]] %s5
  loop: start=0, step=1, limit=6
  $region2: #{inconv_pallas.1} parent=0 // loop_pre_header
    _
  $region3: #{inconv_pallas.1} parent=0 // loop_header
    %s13 = sphi 0, %s17
    %p14 = scmp.ge.s32.totalorder %s13, 6
    %s20 = sphi 0, %s39
    %s21 = sphi 0, %s35
    %s22 = sphi 0, %s31
    %s23 = sphi 0, %s20
    %s24 = sphi 0, %s21
    %s25 = sphi 0, %s22
    %s26 = sphi 0, %s23
    %s27 = sphi 0, %s24
    %s28 = sphi 0, %s25
    %s44 = sphi 0, %s46
    %s47 = sphi 0, %s44
    %s48 = sphi 0, %s47
    %s64 = sphi 0, %s48
    %s68 = sphi 0, %s68
    %s70 = sphi 0, %s68
    %s71 = sphi 0, %s70
    %s85 = sphi 0, %s71
    %s89 = sphi 0, %s89
    %s91 = sphi 0, %s89
    %s92 = sphi 0, %s91
    %s106 = sphi 0, %s92
    %s110 = sphi 0, %s110
    %s112 = sphi 0, %s110
    %s113 = sphi 0, %s112
    %s127 = sphi 0, %s113
    %s131 = sphi 0, %s131
    %s133 = sphi 0, %s131
    %s134 = sphi 0, %s133
    %s148 = sphi 0, %s134
    %s152 = sphi 0, %s152
    %s154 = sphi 0, %s152
    %s155 = sphi 0, %s154
    %s169 = sphi 0, %s155
    %s179 = sphi 0, %s181
    %s182 = sphi 0, %s179
    %s183 = sphi 0, %s182
    %s199 = sphi 0, %s183
  $region4: #{inconv_pallas.1} parent=0 // loop_header_branch
    %16 = sbr.rel (%p14) target = $region8
  $region5: #{inconv_pallas.1} parent=0 // loop_body
    %s18 = ssub.s32 %s13, 1
    %s19 = ssub.s32 %s13, 2
    %s29 = sadd.s32 1, %s22
    %p30 = scmp.ge.s32.totalorder %s29, 1
    %s31 = scalar_select %p30, 0, %s29
    %s32 = sadd.s32 1, %s21
    %s33 = scalar_select %p30, %s32, %s21
    %p34 = scmp.ge.s32.totalorder %s33, 2
    %s35 = scalar_select %p34, 0, %s33
    %s36 = sadd.s32 1, %s20
    %s37 = scalar_select %p34, %s36, %s20
    %p38 = scmp.ge.s32.totalorder %s37, 2
    %s39 = scalar_select %p38, 0, %s37
    %s40 = ssub.s32 %s20, %s39
    %s41 = ssub.s32 %s22, %s31
    %s42 = sor.u32 %s40, %s41
    %p43 = scmp.eq.s32.totalorder %s42, 0
    %s45 = sadd.s32 %s44, 1
    %s46 = scalar_select %p43, %s44, %s45
    %p49 = pneg %p43
    %p50 = scmp.eq.s32.totalorder %s13, 3
    %p51 = por %p49, %p50
    %p52 = scmp.ne.s32.totalorder %s44, %s47
    %p53 = scmp.eq.s32.totalorder %s13, 0
    %p54 = por %p52, %p53
    %p55 = scmp.ne.s32.totalorder %s44, %s47
    %p56 = scmp.eq.s32.totalorder %s18, 3
    %p57 = por %p55, %p56
    %p58 = scmp.ne.s32.totalorder %s47, %s48
    %p59 = scmp.eq.s32.totalorder %s18, 0
    %p60 = por %p58, %p59
    %p61 = scmp.ne.s32.totalorder %s47, %s48
    %p62 = scmp.eq.s32.totalorder %s19, 3
    %p63 = por %p61, %p62
    %p65 = scmp.ne.s32.totalorder %s48, %s64
    %p66 = scmp.eq.s32.totalorder %s19, 0
    %p67 = por %p65, %p66
    %s69 = sadd.s32 %s68, 1
    %p72 = scmp.eq.s32.totalorder %s13, 3
    %p73 = scmp.ne.s32.totalorder %s68, %s70
    %p74 = scmp.eq.s32.totalorder %s13, 0
    %p75 = por %p73, %p74
    %p76 = scmp.ne.s32.totalorder %s68, %s70
    %p77 = scmp.eq.s32.totalorder %s18, 3
    %p78 = por %p76, %p77
    %p79 = scmp.ne.s32.totalorder %s70, %s71
    %p80 = scmp.eq.s32.totalorder %s18, 0
    %p81 = por %p79, %p80
    %p82 = scmp.ne.s32.totalorder %s70, %s71
    %p83 = scmp.eq.s32.totalorder %s19, 3
    %p84 = por %p82, %p83
    %p86 = scmp.ne.s32.totalorder %s71, %s85
    %p87 = scmp.eq.s32.totalorder %s19, 0
    %p88 = por %p86, %p87
    %s90 = sadd.s32 %s89, 1
    %p93 = scmp.eq.s32.totalorder %s13, 3
    %p94 = scmp.ne.s32.totalorder %s89, %s91
    %p95 = scmp.eq.s32.totalorder %s13, 0
    %p96 = por %p94, %p95
    %p97 = scmp.ne.s32.totalorder %s89, %s91
    %p98 = scmp.eq.s32.totalorder %s18, 3
    %p99 = por %p97, %p98
    %p100 = scmp.ne.s32.totalorder %s91, %s92
    %p101 = scmp.eq.s32.totalorder %s18, 0
    %p102 = por %p100, %p101
    %p103 = scmp.ne.s32.totalorder %s91, %s92
    %p104 = scmp.eq.s32.totalorder %s19, 3
    %p105 = por %p103, %p104
    %p107 = scmp.ne.s32.totalorder %s92, %s106
    %p108 = scmp.eq.s32.totalorder %s19, 0
    %p109 = por %p107, %p108
    %s111 = sadd.s32 %s110, 1
    %p114 = scmp.eq.s32.totalorder %s13, 3
    %p115 = scmp.ne.s32.totalorder %s110, %s112
    %p116 = scmp.eq.s32.totalorder %s13, 0
    %p117 = por %p115, %p116
    %p118 = scmp.ne.s32.totalorder %s110, %s112
    %p119 = scmp.eq.s32.totalorder %s18, 3
    %p120 = por %p118, %p119
    %p121 = scmp.ne.s32.totalorder %s112, %s113
    %p122 = scmp.eq.s32.totalorder %s18, 0
    %p123 = por %p121, %p122
    %p124 = scmp.ne.s32.totalorder %s112, %s113
    %p125 = scmp.eq.s32.totalorder %s19, 3
    %p126 = por %p124, %p125
    %p128 = scmp.ne.s32.totalorder %s113, %s127
    %p129 = scmp.eq.s32.totalorder %s19, 0
    %p130 = por %p128, %p129
    %s132 = sadd.s32 %s131, 1
    %p135 = scmp.eq.s32.totalorder %s13, 3
    %p136 = scmp.ne.s32.totalorder %s131, %s133
    %p137 = scmp.eq.s32.totalorder %s13, 0
    %p138 = por %p136, %p137
    %p139 = scmp.ne.s32.totalorder %s131, %s133
    %p140 = scmp.eq.s32.totalorder %s18, 3
    %p141 = por %p139, %p140
    %p142 = scmp.ne.s32.totalorder %s133, %s134
    %p143 = scmp.eq.s32.totalorder %s18, 0
    %p144 = por %p142, %p143
    %p145 = scmp.ne.s32.totalorder %s133, %s134
    %p146 = scmp.eq.s32.totalorder %s19, 3
    %p147 = por %p145, %p146
    %p149 = scmp.ne.s32.totalorder %s134, %s148
    %p150 = scmp.eq.s32.totalorder %s19, 0
    %p151 = por %p149, %p150
    %s153 = sadd.s32 %s152, 1
    %p156 = scmp.eq.s32.totalorder %s13, 3
    %p157 = scmp.ne.s32.totalorder %s152, %s154
    %p158 = scmp.eq.s32.totalorder %s13, 0
    %p159 = por %p157, %p158
    %p160 = scmp.ne.s32.totalorder %s152, %s154
    %p161 = scmp.eq.s32.totalorder %s18, 3
    %p162 = por %p160, %p161
    %p163 = scmp.ne.s32.totalorder %s154, %s155
    %p164 = scmp.eq.s32.totalorder %s18, 0
    %p165 = por %p163, %p164
    %p166 = scmp.ne.s32.totalorder %s154, %s155
    %p167 = scmp.eq.s32.totalorder %s19, 3
    %p168 = por %p166, %p167
    %p170 = scmp.ne.s32.totalorder %s155, %s169
    %p171 = scmp.eq.s32.totalorder %s19, 0
    %p172 = por %p170, %p171
    %s173 = smul.u32 %s22, %s21
    %s174 = smul.u32 %s31, %s35
    %s175 = ssub.s32 %s20, %s39
    %s176 = ssub.s32 %s173, %s174
    %s177 = sor.u32 %s175, %s176
    %p178 = scmp.eq.s32.totalorder %s177, 0
    %s180 = sadd.s32 %s179, 1
    %s181 = scalar_select %p178, %s179, %s180
    %p184 = pneg %p178
    %p185 = scmp.eq.s32.totalorder %s13, 3
    %p186 = por %p184, %p185
    %p187 = scmp.ne.s32.totalorder %s179, %s182
    %p188 = scmp.eq.s32.totalorder %s13, 0
    %p189 = por %p187, %p188
    %p190 = scmp.ne.s32.totalorder %s179, %s182
    %p191 = scmp.eq.s32.totalorder %s18, 3
    %p192 = por %p190, %p191
    %p193 = scmp.ne.s32.totalorder %s182, %s183
    %p194 = scmp.eq.s32.totalorder %s18, 0
    %p195 = por %p193, %p194
    %p196 = scmp.ne.s32.totalorder %s182, %s183
    %p197 = scmp.eq.s32.totalorder %s19, 3
    %p198 = por %p196, %p197
    %p200 = scmp.ne.s32.totalorder %s183, %s199
    %p201 = scmp.eq.s32.totalorder %s19, 0
    %p202 = por %p200, %p201
    %p203 = scmp.le.s32.totalorder 1, %s13
    %p204 = scmp.lt.s32.totalorder %s13, 5
    %p205 = pnand %p203, %p204
    %p206 = pneg %p205
    // Predicated region
    $region9: #{inconv_pallas.1} parent=5 // pred_check
      _
    $region10: #{inconv_pallas.1} parent=5 // pred_check_branch
      %208 = sbr.rel (%p205) target = $region12
    $region11: #{inconv_pallas.1} parent=5 // pred_region
      %s209 = ssub.s32 %s13, 1
      // Predicated region
      $region13: #{inconv_pallas.1} parent=11 // pred_check
        %p210 = pneg %p81
      $region14: #{inconv_pallas.1} parent=11 // pred_check_branch
        %212 = sbr.rel (%p210) target = $region16
      $region15: #{inconv_pallas.1} parent=11 // pred_region
        _
      $region16: #{inconv_pallas.1} parent=11 // pred_fallthru
        _
      // Predicated region
      $region17: #{inconv_pallas.1} parent=11 // pred_check
        %p213 = pneg %p102
      $region18: #{inconv_pallas.1} parent=11 // pred_check_branch
        %215 = sbr.rel (%p213) target = $region20
      $region19: #{inconv_pallas.1} parent=11 // pred_region
        _
      $region20: #{inconv_pallas.1} parent=11 // pred_fallthru
        _
      // Predicated region
      $region21: #{inconv_pallas.1} parent=11 // pred_check
        %p216 = pneg %p123
      $region22: #{inconv_pallas.1} parent=11 // pred_check_branch
        %218 = sbr.rel (%p216) target = $region24
      $region23: #{inconv_pallas.1} parent=11 // pred_region
        _
      $region24: #{inconv_pallas.1} parent=11 // pred_fallthru
        _
      // Predicated region
      $region25: #{inconv_pallas.1} parent=11 // pred_check
        %p219 = pneg %p144
      $region26: #{inconv_pallas.1} parent=11 // pred_check_branch
        %221 = sbr.rel (%p219) target = $region28
      $region27: #{inconv_pallas.1} parent=11 // pred_region
        _
      $region28: #{inconv_pallas.1} parent=11 // pred_fallthru
        _
      // Predicated region
      $region29: #{inconv_pallas.1} parent=11 // pred_check
        %p222 = pneg %p165
      $region30: #{inconv_pallas.1} parent=11 // pred_check_branch
        %224 = sbr.rel (%p222) target = $region32
      $region31: #{inconv_pallas.1} parent=11 // pred_region
        _
      $region32: #{inconv_pallas.1} parent=11 // pred_fallthru
        _
    $region12: #{inconv_pallas.1} parent=5 // pred_fallthru
      _
    %p225 = scmp.lt.s32.totalorder %s13, 4
    // Predicated region
    $region33: #{inconv_pallas.1} parent=5 // pred_check
      %p226 = pneg %p225
    $region34: #{inconv_pallas.1} parent=5 // pred_check_branch
      %228 = sbr.rel (%p226) target = $region36
    $region35: #{inconv_pallas.1} parent=5 // pred_region
      // Predicated region
      $region37: #{inconv_pallas.1} parent=35 // pred_check
        %p229 = pneg %p54
      $region38: #{inconv_pallas.1} parent=35 // pred_check_branch
        %231 = sbr.rel (%p229) target = $region40
      $region39: #{inconv_pallas.1} parent=35 // pred_region
        %s232 = smul.u32 2, %s22
        %p233 = scmp.lt.s32.totalorder %s20, 1
        %s234 = scalar_select %p233, %s20, 1
        %p235 = scmp.lt.s32.totalorder %s232, 1
        %s236 = scalar_select %p235, %s232, 1
        %s237 = smul.addr %s234, 2
        %s238 = sadd.s32 %s236, %s237
        %s239 = smul.addr %s238, 4
        %s240 = scalar_lea.vmem %s0, %s239
        %s241 = smul.u32 2, %s22
      $region40: #{inconv_pallas.1} parent=35 // pred_fallthru
        _
    $region36: #{inconv_pallas.1} parent=5 // pred_fallthru
      _
    %p242 = scmp.le.s32.totalorder 1, %s13
    %p243 = scmp.lt.s32.totalorder %s13, 5
    %p244 = pnand %p242, %p243
    %p245 = pneg %p244
    // Predicated region
    $region41: #{inconv_pallas.1} parent=5 // pred_check
      _
    $region42: #{inconv_pallas.1} parent=5 // pred_check_branch
      %247 = sbr.rel (%p244) target = $region44
    $region43: #{inconv_pallas.1} parent=5 // pred_region
      %s248 = ssub.s32 %s13, 1
      %s249 = smul.u32 2, %s25
      %p250 = scmp.lt.s32.totalorder %s23, 1
      %s251 = scalar_select %p250, %s23, 1
      %p252 = scmp.lt.s32.totalorder %s249, 1
      %s253 = scalar_select %p252, %s249, 1
      %s254 = smul.addr %s251, 2
      %s255 = sadd.s32 %s253, %s254
      %s256 = smul.addr %s255, 4
      %s257 = scalar_lea.vmem %s0, %s256
      %p258 = pneg %p60
      %p259 = pneg %p57
      %p260 = pneg %p81
      %p261 = pneg %p78
      %p262 = pneg %p102
      %p263 = pneg %p99
      %p264 = pneg %p123
      %p265 = pneg %p120
      %p266 = pneg %p144
      %p267 = pneg %p141
      %p268 = pneg %p165
      %p269 = pneg %p162
      %p270 = pneg %p195
      %p271 = pneg %p192
      %s272 = smul.u32 %s25, %s24
      %s273 = smul.u32 2, %s272
      %p274 = scmp.lt.s32.totalorder %s23, 1
      %s275 = scalar_select %p274, %s23, 1
      %p276 = scmp.lt.s32.totalorder %s273, 1
      %s277 = scalar_select %p276, %s273, 1
      %s278 = smul.addr %s275, 2
      %s279 = sadd.s32 %s277, %s278
      %s280 = smul.addr %s279, 8
      %s281 = scalar_lea.vmem %s6, %s280
      %s282 = smul.u32 2, %s25
      %p283 = scmp.lt.s32.totalorder %s23, 1
      %s284 = scalar_select %p283, %s23, 1
      %p285 = scmp.lt.s32.totalorder %s282, 1
      %s286 = scalar_select %p285, %s282, 1
      %s287 = smul.addr %s284, 2
      %s288 = sadd.s32 %s286, %s287
      %s289 = smul.addr %s288, 4
      %s290 = scalar_lea.vmem %s0, %s289
      %s291 = smul.u32 2, %s25
      %s292 = smul.u32 %s25, %s24
      %s293 = smul.u32 2, %s292
      %p294 = scmp.lt.s32.totalorder %s23, 1
      %s295 = scalar_select %p294, %s23, 1
      %p296 = scmp.lt.s32.totalorder %s293, 1
      %s297 = scalar_select %p296, %s293, 1
      %s298 = smul.addr %s295, 2
      %s299 = sadd.s32 %s297, %s298
      %s300 = smul.addr %s299, 8
      %s301 = scalar_lea.vmem %s6, %s300
      %s302 = smul.u32 %s25, %s24
      %s303 = smul.u32 2, %s302
      %v304 = vld [vmem:[%s290] sm:$0xff]
      %v305 = vld [vmem:[%s1] sm:$0xff]
      %307 = vst [vmem:[#allocation1] ss:$2 sm:$0xff] %v304
      %v308 = vld.sshfl [vmem:[#allocation1] sm:$0xff pattern:$0x75316420]
      %v309 = vld.sshfl [vmem:[#allocation1 + $0x8] sm:$0xff pattern:$0x75316420]
      %vm310 = vcmask 31744
      %v312 = vsel %vm310, %v305, 0
      %vm314 = vcmask 1043456
      %v315 = vsel %vm314, %v308, 0
      %v317 = vsel %vm314, %v309, 0
      %319 = vmatpush.msra.mxu0 0.0
      %320 = vmatpush.msra.mxu0 0.0
      %321 = vmatpush.msra.mxu0 0.0
      %322 = vmatpush.msra.mxu0 0.0
      %323 = vmatpush.msra.mxu0 0.0
      %324 = vmatpush.msra.mxu0 0.0
      %325 = vmatpush.msra.mxu0 0.0
      %326 = vmatpush.msra.mxu0 0.0
      %327 = vmatpush.msra.mxu0 0.0
      %328 = vmatpush.msra.mxu0 0.0
      %329 = vmatpush.msra.mxu0 0.0
      %330 = vmatpush.msra.mxu0 0.0
      %331 = vmatpush.msra.mxu0 0.0
      %332 = vmatpush.msra.mxu0 0.0
      %333 = vmatpush.msra.mxu0 0.0
      %334 = vmatpush.msra.mxu0 %v315
      %335 = vmatmul.f32.gmra.mxu0 %v312
      %v336 = vpop.f32.mrf.mxu0
      %v337 = vadd.f32 0.0, %v336
      %338 = vdwg.mxu0
      %339 = vmatpush.msra.mxu0 0.0
      %340 = vmatpush.msra.mxu0 0.0
      %341 = vmatpush.msra.mxu0 0.0
      %342 = vmatpush.msra.mxu0 0.0
      %343 = vmatpush.msra.mxu0 0.0
      %344 = vmatpush.msra.mxu0 0.0
      %345 = vmatpush.msra.mxu0 0.0
      %346 = vmatpush.msra.mxu0 0.0
      %347 = vmatpush.msra.mxu0 0.0
      %348 = vmatpush.msra.mxu0 0.0
      %349 = vmatpush.msra.mxu0 0.0
      %350 = vmatpush.msra.mxu0 0.0
      %351 = vmatpush.msra.mxu0 0.0
      %352 = vmatpush.msra.mxu0 0.0
      %353 = vmatpush.msra.mxu0 0.0
      %354 = vmatpush.msra.mxu0 %v317
      %355 = vmatmul.f32.gmra.mxu0 %v312
      %v356 = vpop.f32.mrf.mxu0
      %v357 = vadd.f32 0.0, %v356
      %358 = vdwg.mxu0
      %p359 = scmp.eq.s32.totalorder %s24, 0
      %p360 = scmp.eq.s32.totalorder %s25, 0
      %p361 = pnand %p359, %p360
      %p362 = pneg %p361
      // Predicated region
      $region45: #{inconv_pallas.1} parent=43 // pred_check
        _
      $region46: #{inconv_pallas.1} parent=43 // pred_check_branch
        %364 = sbr.rel (%p361) target = $region48
      $region47: #{inconv_pallas.1} parent=43 // pred_region
        %vm365 = vcmask 7168
        %366 = vst.msk [vmem:[#allocation2] sm:$0xff] %vm365, 0.0
        %367 = vst.msk [vmem:[#allocation3] sm:$0xff] %vm365, 0.0
      $region48: #{inconv_pallas.1} parent=43 // pred_fallthru
        _
      // Predicated region
      $region49: #{inconv_pallas.1} parent=43 // pred_check
        %p368 = pneg %p359
      $region50: #{inconv_pallas.1} parent=43 // pred_check_branch
        %370 = sbr.rel (%p368) target = $region52
      $region51: #{inconv_pallas.1} parent=43 // pred_region
        %v371 = vld [vmem:[#allocation2] sm:$0xff]
        %v372 = vadd.f32 %v337, %v357
        %373 = vadd.xlane.f32.xlu0 %v372
        %v374 = vpop.xlane.xlu0 %373
        %v375 = vadd.f32 %v371, %v374
        %vm376 = vcmask 7168
        %377 = vst.msk [vmem:[#allocation2] sm:$0xff] %vm376, %v375
        %v378 = vld [vmem:[#allocation3] sm:$0xff]
        %v379 = vmul.f32 %v337, %v337
        %v380 = vmul.f32 %v357, %v357
        %v381 = vadd.f32 %v379, %v380
        %382 = vadd.xlane.f32.xlu0 %v381
        %v383 = vpop.xlane.xlu0 %382
        %v384 = vadd.f32 %v378, %v383
        %385 = vst.msk [vmem:[#allocation3] sm:$0xff] %vm376, %v384
      $region52: #{inconv_pallas.1} parent=43 // pred_fallthru
        _
      %p386 = scmp.eq.s32.totalorder %s24, 1
      %p387 = pnand %p386, %p360
      %p388 = pneg %p387
      // Predicated region
      $region53: #{inconv_pallas.1} parent=43 // pred_check
        _
      $region54: #{inconv_pallas.1} parent=43 // pred_check_branch
        %390 = sbr.rel (%p387) target = $region56
      $region55: #{inconv_pallas.1} parent=43 // pred_region
        %v391 = vld [vmem:[%s2] sm:$0xff]
        %v392 = vld [vmem:[%s3] sm:$0xff]
        %v393 = vld [vmem:[%s4] sm:$0xff]
        %v394 = vld [vmem:[#allocation2] sm:$0xff]
        %v395 = vld [vmem:[#allocation3] sm:$0xff]
        %vm396 = vcmask 7168
        %v397 = vsel %vm396, %v394, 0.0
        %398 = vadd.xlane.f32.xlu0 %v397
        %v399 = vpop.xlane.xlu0 %398
        %v400 = vrot.slane %v399, 4
        %v401 = vadd.f32 %v399, %v400
        %v402 = vrot.slane %v401, 2
        %v403 = vadd.f32 %v401, %v402
        %v404 = vrot.slane %v403, 1
        %v405 = vadd.f32 %v403, %v404
        %s406 = vtos %v405
        %v407 = vsel %vm396, %v391, 0.0
        %408 = vadd.xlane.f32.xlu0 %v407
        %v409 = vpop.xlane.xlu0 %408
        %v410 = vrot.slane %v409, 4
        %v411 = vadd.f32 %v409, %v410
        %v412 = vrot.slane %v411, 2
        %v413 = vadd.f32 %v411, %v412
        %v414 = vrot.slane %v413, 1
        %v415 = vadd.f32 %v413, %v414
        %s416 = vtos %v415
        %s417 = smul.f32 %s416, 256.0
        %s418 = sadd.f32 %s406, %s417
        %v419 = vrcp.pop 2048.0
        %v420 = vmul.f32 2048.0, %v419
        %v421 = vsub.f32 1.0, %v420
        %v422 = vmul.f32 %v419, %v421
        %v423 = vadd.f32 %v419, %v422
        %vm424 = vweird.f32 %v419
        %v425 = vsel %vm424, %v419, %v423
        %s426 = vtos %v425
        %s427 = smul.f32 %s418, %s426
        %v428 = vstv %s427
        %v429 = vsub.f32 %v391, %v428
        %v430 = vmul.f32 %v429, 2.0
        %v431 = vmul.f32 %v430, %v394
        %v432 = vadd.f32 %v395, %v431
        %v433 = vmul.f32 %v429, %v429
        %v434 = vmul.f32 %v433, 256.0
        %v435 = vadd.f32 %v432, %v434
        %v436 = vsel %vm396, %v435, 0.0
        %437 = vadd.xlane.f32.xlu0 %v436
        %v438 = vpop.xlane.xlu0 %437
        %v439 = vrot.slane %v438, 4
        %v440 = vadd.f32 %v438, %v439
        %v441 = vrot.slane %v440, 2
        %v442 = vadd.f32 %v440, %v441
        %v443 = vrot.slane %v442, 1
        %v444 = vadd.f32 %v442, %v443
        %s445 = vtos %v444
        %v446 = vrcp.pop 2048.0
        %v447 = vmul.f32 2048.0, %v446
        %v448 = vsub.f32 1.0, %v447
        %v449 = vmul.f32 %v446, %v448
        %v450 = vadd.f32 %v446, %v449
        %vm451 = vweird.f32 %v446
        %v452 = vsel %vm451, %v446, %v450
        %s453 = vtos %v452
        %s454 = smul.f32 %s445, %s453
        %s455 = smax.f32 %s454, 0.0
        %s456 = sadd.f32 %s455, 1e-08
        %v457 = vstv %s456
        %v458 = vrsqrt.pop %v457
        %v459 = vmul.f32 %v458, %v457
        %v460 = vmul.f32 %v459, %v458
        %v461 = vmul.f32 0.5, %v460
        %v462 = vsub.f32 1.5, %v461
        %v463 = vmul.f32 %v458, %v462
        %vm464 = vweird.f32 %v457
        %vm465 = vweird.f32 %v458
        %vm466 = vmor %vm464, %vm465
        %v467 = vsel %vm466, %v458, %v463
        %s468 = vtos %v467
        %v469 = vstv %s468
        %v470 = vmul.f32 %v392, %v469
        %471 = vst.msk [vmem:[#allocation4] sm:$0xff] %vm396, %v470
        %v472 = vmul.f32 %v429, %v470
        %v473 = vadd.f32 %v393, %v472
        %474 = vst.msk [vmem:[#allocation5] sm:$0xff] %vm396, %v473
      $region56: #{inconv_pallas.1} parent=43 // pred_fallthru
        _
      // Predicated region
      $region57: #{inconv_pallas.1} parent=43 // pred_check
        %p475 = pneg %p386
      $region58: #{inconv_pallas.1} parent=43 // pred_check_branch
        %477 = sbr.rel (%p475) target = $region60
      $region59: #{inconv_pallas.1} parent=43 // pred_region
        %v478 = vld [vmem:[#allocation4] sm:$0xff]
        %480 = vset.pattern.permute.xlu0 0
        %481 = vperm.xlu0 %480, %v478
        %v482 = vpop.permute.xlu0 %481
        %v484 = vmul.f32 %v337, %v482
        %v485 = vmul.f32 %v357, %v482
        %v486 = vld [vmem:[#allocation5] sm:$0xff]
        %488 = vset.pattern.permute.xlu0 0
        %489 = vperm.xlu0 %488, %v486
        %v490 = vpop.permute.xlu0 %489
        %v492 = vadd.f32 %v484, %v490
        %v493 = vadd.f32 %v485, %v490
        %s494 = sld [smem:[#allocation6]]
        %vm495 = vcmp.ge.f32.partialorder %v492, 0.0
        %vm496 = vcmp.ge.f32.partialorder %v493, 0.0
        %v497 = vstv %s494
        %v498 = vsel %vm495, 1.0, %v497
        %v499 = vsel %vm496, 1.0, %v497
        %v500 = vmul.f32 %v492, %v498
        %v501 = vmul.f32 %v493, %v499
        %502 = vst [vmem:[%s301] sm:$0xff] %v500
        %503 = vst [vmem:[%s301 + $0x8] sm:$0xff] %v501
      $region60: #{inconv_pallas.1} parent=43 // pred_fallthru
        _
      %s504 = smul.u32 %s25, %s24
      %s505 = smul.u32 2, %s504
      %p506 = scmp.lt.s32.totalorder %s23, 1
      %s507 = scalar_select %p506, %s23, 1
      %p508 = scmp.lt.s32.totalorder %s505, 1
      %s509 = scalar_select %p508, %s505, 1
      %s510 = smul.addr %s507, 2
      %s511 = sadd.s32 %s509, %s510
      %s512 = smul.addr %s511, 8
      %s513 = scalar_lea.vmem %s6, %s512
      // Predicated region
      $region61: #{inconv_pallas.1} parent=43 // pred_check
        %p514 = pneg %p192
      $region62: #{inconv_pallas.1} parent=43 // pred_check_branch
        %516 = sbr.rel (%p514) target = $region64
      $region63: #{inconv_pallas.1} parent=43 // pred_region
        %s517 = smul.u32 %s25, %s24
        %s518 = smul.u32 2, %s517
      $region64: #{inconv_pallas.1} parent=43 // pred_fallthru
        _
    $region44: #{inconv_pallas.1} parent=5 // pred_fallthru
      _
    %p519 = scmp.le.s32.totalorder 2, %s13
    // Predicated region
    $region65: #{inconv_pallas.1} parent=5 // pred_check
      %p520 = pneg %p519
    $region66: #{inconv_pallas.1} parent=5 // pred_check_branch
      %522 = sbr.rel (%p520) target = $region68
    $region67: #{inconv_pallas.1} parent=5 // pred_region
      %s523 = ssub.s32 %s13, 2
      // Predicated region
      $region69: #{inconv_pallas.1} parent=67 // pred_check
        %p524 = pneg %p198
      $region70: #{inconv_pallas.1} parent=67 // pred_check_branch
        %526 = sbr.rel (%p524) target = $region72
      $region71: #{inconv_pallas.1} parent=67 // pred_region
        %s527 = smul.u32 %s28, %s27
        %s528 = smul.u32 2, %s527
        %p529 = scmp.lt.s32.totalorder %s26, 1
        %s530 = scalar_select %p529, %s26, 1
        %p531 = scmp.lt.s32.totalorder %s528, 1
        %s532 = scalar_select %p531, %s528, 1
        %s533 = smul.addr %s530, 2
        %s534 = sadd.s32 %s532, %s533
        %s535 = smul.addr %s534, 8
        %s536 = scalar_lea.vmem %s6, %s535
      $region72: #{inconv_pallas.1} parent=67 // pred_fallthru
        _
    $region68: #{inconv_pallas.1} parent=5 // pred_fallthru
      _
  $region6: #{inconv_pallas.1} parent=0 // loop_footer
    %s17 = sadd.s32 1, %s13
  $region7: #{inconv_pallas.1} parent=0 // loop_footer_branch
    %12 = sbr.rel target = $region3
  $region8: #{inconv_pallas.1} parent=0 // loop_exit
    _

</llo_original>
